<compile_context>
chip_gen: v6e
topology: v6e:2x2x1
jax: 0.10.0
libtpu: 0.0.40
codegen_flags: <defaults>
</compile_context>

<pallas_src>
import functools

import jax
import jax.numpy as jnp
from jax.experimental import pallas as pl
from jax.experimental.pallas import tpu as pltpu

LANE = 128  # output feature dims are padded to one full lane width


# --------------------------------------------------------------------------
# Fused Pallas kernel: the entire Net forward in one invocation (no grid).
# --------------------------------------------------------------------------
def _net_fused_kernel(p_ref, x_ref,
                      w0_1_ref, wt_1_ref, v_1_ref, b_1_ref,
                      w0_2_ref, wt_2_ref, v_2_ref, b_2_ref,
                      o_ref, *, num_stacks, num_layers, out1, out2):
    S, T = num_stacks, num_layers
    P = p_ref[...]                      # (N, N)   bf16
    x0 = x_ref[...]                     # (N, in1) f32 (real width, unpadded)
    n_nodes = x0.shape[0]
    inv_s = 1.0 / float(S)

    def sarma(x_in, w0_ref, wt_ref, v_ref, b_ref, out_ch):
        """h^{t+1} = relu(P@h^t @ W_st + x_in @ V_st + b_st), mean over stacks.

        x_in: (N, c_in) f32 at real feature width.
        Returns (N, 128) f32; columns >= out_ch are exactly 0 (zero weight/bias
        pads + relu(0)=0), so padded lanes never contaminate the real output.
        """
        x_bf = x_in.astype(jnp.bfloat16)

        # Root term for every (stack, layer) in one wide MXU push: (N, S*T*128).
        xv = jnp.dot(x_bf, v_ref[...],
                     preferred_element_type=jnp.float32) + b_ref[...]

        # t = 0: h == x_in for every stack -> one propagation + one batched W.
        px = jnp.dot(P, x_bf, preferred_element_type=jnp.float32)      # (N, c_in)
        pre0 = jnp.dot(px.astype(jnp.bfloat16), w0_ref[...],
                       preferred_element_type=jnp.float32)             # (N, S*128)

        acc = jnp.zeros((n_nodes, LANE), jnp.float32)
        for s in range(S):                         # tiny static loops -> unrolled
            h = jnp.maximum(pre0[:, s * LANE:(s + 1) * LANE]
                            + xv[:, (s * T) * LANE:(s * T + 1) * LANE], 0.0)
            for t in range(1, T):
                # TODO(synk): on v6e the tiny (N,N)@(N,out_ch) P@h could move to
                # the (idle) VPU as a broadcast-MAC to skip under-filled MXU pushes.
                h_r = h[:, :out_ch].astype(jnp.bfloat16)                # (N, out_ch)
                ph = jnp.dot(P, h_r, preferred_element_type=jnp.float32)
                idx = s * (T - 1) + (t - 1)
                w_st = wt_ref[:, idx * LANE:(idx + 1) * LANE]           # (out_ch, 128)
                pre = jnp.dot(ph.astype(jnp.bfloat16), w_st,
                              preferred_element_type=jnp.float32)
                c0 = (s * T + t) * LANE
                h = jnp.maximum(pre + xv[:, c0:c0 + LANE], 0.0)
            acc = acc + h
        return acc * inv_s                                              # mean over stacks

    # conv1 -> tanh (slice to real width first: conv2 contracts over out1 only)
    h1 = jnp.tanh(sarma(x0, w0_1_ref, wt_1_ref, v_1_ref, b_1_ref, out1)[:, :out1])
    # conv2
    out = sarma(h1, w0_2_ref, wt_2_ref, v_2_ref, b_2_ref, out2)
    o_ref[...] = out.astype(o_ref.dtype)


def _vmem_spec():
    return pl.BlockSpec(memory_space=pltpu.MemorySpace.VMEM)


def net_forward(x, P_bf, params1, params2, hidden_channels, out_channels,
                num_stacks, num_layers):
    """Single no-grid pallas_call for the whole Net forward."""
    N = x.shape[0]
    w0_1, wt_1, v_1, b_1 = params1
    w0_2, wt_2, v_2, b_2 = params2

    kernel = functools.partial(_net_fused_kernel,
                               num_stacks=num_stacks, num_layers=num_layers,
                               out1=hidden_channels, out2=out_channels)

    inputs = (P_bf, x, w0_1, wt_1, v_1, b_1, w0_2, wt_2, v_2, b_2)

    def conv_flops(n, c_in, c_out, S, T):
        f = 2 * n * c_in * (S * T * LANE)                 # x @ V_all
        f += 2 * n * n * c_in                             # P @ x   (t = 0)
        f += 2 * n * c_in * (S * LANE)                    # batched t = 0 W
        f += S * (T - 1) * (2 * n * n * c_out + 2 * n * c_out * LANE)
        return f

    flops = (conv_flops(N, x.shape[1], hidden_channels, num_stacks, num_layers)
             + conv_flops(N, hidden_channels, out_channels, num_stacks, num_layers))
    bytes_accessed = (sum(int(a.size) * a.dtype.itemsize for a in inputs)
                      + N * LANE * 4)

    out_pad = pl.pallas_call(
        kernel,
        out_shape=jax.ShapeDtypeStruct((N, LANE), jnp.float32),
        in_specs=[_vmem_spec() for _ in inputs],
        out_specs=_vmem_spec(),
        cost_estimate=pl.CostEstimate(flops=flops,
                                      transcendentals=N * hidden_channels,
                                      bytes_accessed=bytes_accessed),
    )(*inputs)
    return out_pad[:, :out_channels]


# --------------------------------------------------------------------------
# Parameter init: real-shape glorot, output columns padded to 128 lanes,
# contraction dims kept at real width, packed lane-wise per (stack, layer),
# cast to bf16.  Bias stays f32 (zeros, PyG-style init).
# --------------------------------------------------------------------------
def glorot(key, shape):
    fan_in, fan_out = shape
    limit = (6.0 / (fan_in + fan_out)) ** 0.5
    return jax.random.uniform(key, shape, jnp.float32, -limit, limit)


def _pad_cols(m, lane=LANE):
    out = jnp.zeros((m.shape[0], lane), jnp.float32)
    return out.at[:, : m.shape[1]].set(m)


def init_sarma_params(key, in_ch, out_ch, num_stacks, num_layers):
    """Returns (w0, wt, v, b):
      w0: (in_ch,  S*128)          — W for t=0, stacks packed along lanes
      wt: (out_ch, max(T-1,1)*S*128) — W for t>=1, packed s-major/t-minor
      v : (in_ch,  S*T*128)        — V per (stack, layer), s-major/t-minor
      b : (1,      S*T*128)        — zeros (f32)
    Padding columns are zero so padded math == real math (relu(0)=0)."""
    S, T = num_stacks, num_layers
    w0_cols, wt_cols, v_cols = [], [], []
    for s in range(S):
        key, k = jax.random.split(key)
        w0_cols.append(_pad_cols(glorot(k, (in_ch, out_ch))))
        for t in range(1, T):
            key, k = jax.random.split(key)
            wt_cols.append(_pad_cols(glorot(k, (out_ch, out_ch))))
        for t in range(T):
            key, k = jax.random.split(key)
            v_cols.append(_pad_cols(glorot(k, (in_ch, out_ch))))
    w0 = jnp.concatenate(w0_cols, axis=1).astype(jnp.bfloat16)
    if T > 1:
        wt = jnp.concatenate(wt_cols, axis=1).astype(jnp.bfloat16)
    else:
        wt = jnp.zeros((out_ch, LANE), jnp.bfloat16)   # unused when T == 1
    v = jnp.concatenate(v_cols, axis=1).astype(jnp.bfloat16)
    b = jnp.zeros((1, S * T * LANE), jnp.float32)
    return (w0, wt, v, b), key


def build_propagation_matrix(edge_index, num_nodes, K):
    src, dst = edge_index[0], edge_index[1]
    A = jnp.zeros((num_nodes, num_nodes), jnp.float32)
    A = A.at[src, dst].set(1.0)
    A = A.at[dst, src].set(1.0)                      # undirected
    A = A + jnp.eye(num_nodes, dtype=jnp.float32)    # self loops
    A = jnp.minimum(A, 1.0)
    deg = jnp.sum(A, axis=1)
    d_inv_sqrt = 1.0 / jnp.sqrt(jnp.maximum(deg, 1e-12))
    A_hat = A * d_inv_sqrt[:, None] * d_inv_sqrt[None, :]
    P = jnp.eye(num_nodes, dtype=jnp.float32)
    for _ in range(K):
        P = P @ A_hat
    return P


# --------------------------------------------------------------------------
if __name__ == "__main__":
    # Small shapes consistent with the module's forward.
    N = 16              # number of graph nodes
    in_channels = 8
    hidden_channels = 16
    out_channels = 8
    num_stacks = 2
    num_layers = 2
    K = 2               # SGC hop count
    num_edges = 32

    key = jax.random.PRNGKey(0)
    key, kx, ke = jax.random.split(key, 3)
    x = jax.random.normal(kx, (N, in_channels), jnp.float32)
    edge_index = jax.random.randint(ke, (2, num_edges), 0, N)

    P_bf = build_propagation_matrix(edge_index, N, K).astype(jnp.bfloat16)

    params1, key = init_sarma_params(key, in_channels, hidden_channels,
                                     num_stacks, num_layers)
    params2, key = init_sarma_params(key, hidden_channels, out_channels,
                                     num_stacks, num_layers)

    out = net_forward(x, P_bf, params1, params2,
                      hidden_channels, out_channels, num_stacks, num_layers)
    out = jax.block_until_ready(out)
    assert out.shape == (N, out_channels)
    assert out.dtype == jnp.float32
    print("KERNEL_OK")
</pallas_src>

<mosaic_0001>
module attributes {stable_mosaic.version = 11 : i64} {
  func.func @_net_fused_kernel(%arg0: memref<16x16xbf16, #tpu.memory_space<vmem>>, %arg1: memref<16x8xf32, #tpu.memory_space<vmem>>, %arg2: memref<8x256xbf16, #tpu.memory_space<vmem>>, %arg3: memref<16x256xbf16, #tpu.memory_space<vmem>>, %arg4: memref<8x512xbf16, #tpu.memory_space<vmem>>, %arg5: memref<1x512xf32, #tpu.memory_space<vmem>>, %arg6: memref<16x256xbf16, #tpu.memory_space<vmem>>, %arg7: memref<8x256xbf16, #tpu.memory_space<vmem>>, %arg8: memref<16x512xbf16, #tpu.memory_space<vmem>>, %arg9: memref<1x512xf32, #tpu.memory_space<vmem>>, %arg10: memref<16x128xf32, #tpu.memory_space<vmem>>) attributes {dimension_semantics = [], scalar_prefetch = 0 : i64, scratch_operands = 0 : i64, tpu.core_type = #tpu.core_type<tc>} {
    %c0 = arith.constant 0 : index
    %c0_0 = arith.constant 0 : index
    %0 = vector.load %arg0[%c0, %c0_0] : memref<16x16xbf16, #tpu.memory_space<vmem>>, vector<16x16xbf16>
    %c0_1 = arith.constant 0 : index
    %c0_2 = arith.constant 0 : index
    %1 = vector.load %arg1[%c0_1, %c0_2] : memref<16x8xf32, #tpu.memory_space<vmem>>, vector<16x8xf32>
    %2 = arith.truncf %1 : vector<16x8xf32> to vector<16x8xbf16>
    %c0_3 = arith.constant 0 : index
    %c0_4 = arith.constant 0 : index
    %3 = vector.load %arg4[%c0_3, %c0_4] : memref<8x512xbf16, #tpu.memory_space<vmem>>, vector<8x512xbf16>
    %cst = arith.constant dense<0.000000e+00> : vector<16x512xf32>
    %4 = tpu.matmul %2, %3, %cst {dimension_numbers = #tpu.dot_dimension_numbers<[1], [0], [0], [1], [0, 0, 1, 1], [], []>} : vector<16x8xbf16>, vector<8x512xbf16>, vector<16x512xf32> -> vector<16x512xf32>
    %c0_5 = arith.constant 0 : index
    %c0_6 = arith.constant 0 : index
    %5 = vector.load %arg5[%c0_5, %c0_6] : memref<1x512xf32, #tpu.memory_space<vmem>>, vector<1x512xf32>
    %6 = vector.broadcast %5 : vector<1x512xf32> to vector<16x512xf32>
    %7 = arith.addf %4, %6 : vector<16x512xf32>
    %cst_7 = arith.constant dense<0.000000e+00> : vector<16x8xf32>
    %8 = tpu.matmul %0, %2, %cst_7 {dimension_numbers = #tpu.dot_dimension_numbers<[1], [0], [0], [1], [0, 0, 1, 1], [], []>} : vector<16x16xbf16>, vector<16x8xbf16>, vector<16x8xf32> -> vector<16x8xf32>
    %9 = arith.truncf %8 : vector<16x8xf32> to vector<16x8xbf16>
    %c0_8 = arith.constant 0 : index
    %c0_9 = arith.constant 0 : index
    %10 = vector.load %arg2[%c0_8, %c0_9] : memref<8x256xbf16, #tpu.memory_space<vmem>>, vector<8x256xbf16>
    %cst_10 = arith.constant dense<0.000000e+00> : vector<16x256xf32>
    %11 = tpu.matmul %9, %10, %cst_10 {dimension_numbers = #tpu.dot_dimension_numbers<[1], [0], [0], [1], [0, 0, 1, 1], [], []>} : vector<16x8xbf16>, vector<8x256xbf16>, vector<16x256xf32> -> vector<16x256xf32>
    %cst_11 = arith.constant 0.000000e+00 : f32
    %12 = vector.broadcast %cst_11 : f32 to vector<16x128xf32>
    %13 = vector.extract_strided_slice %11 {offsets = [0, 0], sizes = [16, 128], strides = [1, 1]} : vector<16x256xf32> to vector<16x128xf32>
    %14 = vector.extract_strided_slice %7 {offsets = [0, 0], sizes = [16, 128], strides = [1, 1]} : vector<16x512xf32> to vector<16x128xf32>
    %15 = arith.addf %13, %14 : vector<16x128xf32>
    %cst_12 = arith.constant 0.000000e+00 : f32
    %16 = vector.broadcast %cst_12 : f32 to vector<16x128xf32>
    %17 = arith.maximumf %15, %16 : vector<16x128xf32>
    %18 = vector.extract_strided_slice %17 {offsets = [0, 0], sizes = [16, 16], strides = [1, 1]} : vector<16x128xf32> to vector<16x16xf32>
    %19 = arith.truncf %18 : vector<16x16xf32> to vector<16x16xbf16>
    %cst_13 = arith.constant dense<0.000000e+00> : vector<16x16xf32>
    %20 = tpu.matmul %0, %19, %cst_13 {dimension_numbers = #tpu.dot_dimension_numbers<[1], [0], [0], [1], [0, 0, 1, 1], [], []>} : vector<16x16xbf16>, vector<16x16xbf16>, vector<16x16xf32> -> vector<16x16xf32>
    %c0_14 = arith.constant 0 : index
    %c0_15 = arith.constant 0 : index
    %21 = vector.load %arg3[%c0_14, %c0_15] : memref<16x256xbf16, #tpu.memory_space<vmem>>, vector<16x128xbf16>
    %22 = arith.truncf %20 : vector<16x16xf32> to vector<16x16xbf16>
    %cst_16 = arith.constant dense<0.000000e+00> : vector<16x128xf32>
    %23 = tpu.matmul %22, %21, %cst_16 {dimension_numbers = #tpu.dot_dimension_numbers<[1], [0], [0], [1], [0, 0, 1, 1], [], []>} : vector<16x16xbf16>, vector<16x128xbf16>, vector<16x128xf32> -> vector<16x128xf32>
    %24 = vector.extract_strided_slice %7 {offsets = [0, 128], sizes = [16, 128], strides = [1, 1]} : vector<16x512xf32> to vector<16x128xf32>
    %25 = arith.addf %23, %24 : vector<16x128xf32>
    %cst_17 = arith.constant 0.000000e+00 : f32
    %26 = vector.broadcast %cst_17 : f32 to vector<16x128xf32>
    %27 = arith.maximumf %25, %26 : vector<16x128xf32>
    %28 = arith.addf %12, %27 : vector<16x128xf32>
    %29 = vector.extract_strided_slice %11 {offsets = [0, 128], sizes = [16, 128], strides = [1, 1]} : vector<16x256xf32> to vector<16x128xf32>
    %30 = vector.extract_strided_slice %7 {offsets = [0, 256], sizes = [16, 128], strides = [1, 1]} : vector<16x512xf32> to vector<16x128xf32>
    %31 = arith.addf %29, %30 : vector<16x128xf32>
    %cst_18 = arith.constant 0.000000e+00 : f32
    %32 = vector.broadcast %cst_18 : f32 to vector<16x128xf32>
    %33 = arith.maximumf %31, %32 : vector<16x128xf32>
    %34 = vector.extract_strided_slice %33 {offsets = [0, 0], sizes = [16, 16], strides = [1, 1]} : vector<16x128xf32> to vector<16x16xf32>
    %35 = arith.truncf %34 : vector<16x16xf32> to vector<16x16xbf16>
    %cst_19 = arith.constant dense<0.000000e+00> : vector<16x16xf32>
    %36 = tpu.matmul %0, %35, %cst_19 {dimension_numbers = #tpu.dot_dimension_numbers<[1], [0], [0], [1], [0, 0, 1, 1], [], []>} : vector<16x16xbf16>, vector<16x16xbf16>, vector<16x16xf32> -> vector<16x16xf32>
    %c0_20 = arith.constant 0 : index
    %c128 = arith.constant 128 : index
    %37 = vector.load %arg3[%c0_20, %c128] : memref<16x256xbf16, #tpu.memory_space<vmem>>, vector<16x128xbf16>
    %38 = arith.truncf %36 : vector<16x16xf32> to vector<16x16xbf16>
    %cst_21 = arith.constant dense<0.000000e+00> : vector<16x128xf32>
    %39 = tpu.matmul %38, %37, %cst_21 {dimension_numbers = #tpu.dot_dimension_numbers<[1], [0], [0], [1], [0, 0, 1, 1], [], []>} : vector<16x16xbf16>, vector<16x128xbf16>, vector<16x128xf32> -> vector<16x128xf32>
    %40 = vector.extract_strided_slice %7 {offsets = [0, 384], sizes = [16, 128], strides = [1, 1]} : vector<16x512xf32> to vector<16x128xf32>
    %41 = arith.addf %39, %40 : vector<16x128xf32>
    %cst_22 = arith.constant 0.000000e+00 : f32
    %42 = vector.broadcast %cst_22 : f32 to vector<16x128xf32>
    %43 = arith.maximumf %41, %42 : vector<16x128xf32>
    %44 = arith.addf %28, %43 : vector<16x128xf32>
    %cst_23 = arith.constant 5.000000e-01 : f32
    %45 = vector.broadcast %cst_23 : f32 to vector<16x128xf32>
    %46 = arith.mulf %44, %45 : vector<16x128xf32>
    %47 = vector.extract_strided_slice %46 {offsets = [0, 0], sizes = [16, 16], strides = [1, 1]} : vector<16x128xf32> to vector<16x16xf32>
    %48 = math.tanh %47 : vector<16x16xf32>
    %49 = arith.truncf %48 : vector<16x16xf32> to vector<16x16xbf16>
    %c0_24 = arith.constant 0 : index
    %c0_25 = arith.constant 0 : index
    %50 = vector.load %arg8[%c0_24, %c0_25] : memref<16x512xbf16, #tpu.memory_space<vmem>>, vector<16x512xbf16>
    %cst_26 = arith.constant dense<0.000000e+00> : vector<16x512xf32>
    %51 = tpu.matmul %49, %50, %cst_26 {dimension_numbers = #tpu.dot_dimension_numbers<[1], [0], [0], [1], [0, 0, 1, 1], [], []>} : vector<16x16xbf16>, vector<16x512xbf16>, vector<16x512xf32> -> vector<16x512xf32>
    %c0_27 = arith.constant 0 : index
    %c0_28 = arith.constant 0 : index
    %52 = vector.load %arg9[%c0_27, %c0_28] : memref<1x512xf32, #tpu.memory_space<vmem>>, vector<1x512xf32>
    %53 = vector.broadcast %52 : vector<1x512xf32> to vector<16x512xf32>
    %54 = arith.addf %51, %53 : vector<16x512xf32>
    %cst_29 = arith.constant dense<0.000000e+00> : vector<16x16xf32>
    %55 = tpu.matmul %0, %49, %cst_29 {dimension_numbers = #tpu.dot_dimension_numbers<[1], [0], [0], [1], [0, 0, 1, 1], [], []>} : vector<16x16xbf16>, vector<16x16xbf16>, vector<16x16xf32> -> vector<16x16xf32>
    %56 = arith.truncf %55 : vector<16x16xf32> to vector<16x16xbf16>
    %c0_30 = arith.constant 0 : index
    %c0_31 = arith.constant 0 : index
    %57 = vector.load %arg6[%c0_30, %c0_31] : memref<16x256xbf16, #tpu.memory_space<vmem>>, vector<16x256xbf16>
    %cst_32 = arith.constant dense<0.000000e+00> : vector<16x256xf32>
    %58 = tpu.matmul %56, %57, %cst_32 {dimension_numbers = #tpu.dot_dimension_numbers<[1], [0], [0], [1], [0, 0, 1, 1], [], []>} : vector<16x16xbf16>, vector<16x256xbf16>, vector<16x256xf32> -> vector<16x256xf32>
    %cst_33 = arith.constant 0.000000e+00 : f32
    %59 = vector.broadcast %cst_33 : f32 to vector<16x128xf32>
    %60 = vector.extract_strided_slice %58 {offsets = [0, 0], sizes = [16, 128], strides = [1, 1]} : vector<16x256xf32> to vector<16x128xf32>
    %61 = vector.extract_strided_slice %54 {offsets = [0, 0], sizes = [16, 128], strides = [1, 1]} : vector<16x512xf32> to vector<16x128xf32>
    %62 = arith.addf %60, %61 : vector<16x128xf32>
    %cst_34 = arith.constant 0.000000e+00 : f32
    %63 = vector.broadcast %cst_34 : f32 to vector<16x128xf32>
    %64 = arith.maximumf %62, %63 : vector<16x128xf32>
    %65 = vector.extract_strided_slice %64 {offsets = [0, 0], sizes = [16, 8], strides = [1, 1]} : vector<16x128xf32> to vector<16x8xf32>
    %66 = arith.truncf %65 : vector<16x8xf32> to vector<16x8xbf16>
    %cst_35 = arith.constant dense<0.000000e+00> : vector<16x8xf32>
    %67 = tpu.matmul %0, %66, %cst_35 {dimension_numbers = #tpu.dot_dimension_numbers<[1], [0], [0], [1], [0, 0, 1, 1], [], []>} : vector<16x16xbf16>, vector<16x8xbf16>, vector<16x8xf32> -> vector<16x8xf32>
    %c0_36 = arith.constant 0 : index
    %c0_37 = arith.constant 0 : index
    %68 = vector.load %arg7[%c0_36, %c0_37] : memref<8x256xbf16, #tpu.memory_space<vmem>>, vector<8x128xbf16>
    %69 = arith.truncf %67 : vector<16x8xf32> to vector<16x8xbf16>
    %cst_38 = arith.constant dense<0.000000e+00> : vector<16x128xf32>
    %70 = tpu.matmul %69, %68, %cst_38 {dimension_numbers = #tpu.dot_dimension_numbers<[1], [0], [0], [1], [0, 0, 1, 1], [], []>} : vector<16x8xbf16>, vector<8x128xbf16>, vector<16x128xf32> -> vector<16x128xf32>
    %71 = vector.extract_strided_slice %54 {offsets = [0, 128], sizes = [16, 128], strides = [1, 1]} : vector<16x512xf32> to vector<16x128xf32>
    %72 = arith.addf %70, %71 : vector<16x128xf32>
    %cst_39 = arith.constant 0.000000e+00 : f32
    %73 = vector.broadcast %cst_39 : f32 to vector<16x128xf32>
    %74 = arith.maximumf %72, %73 : vector<16x128xf32>
    %75 = arith.addf %59, %74 : vector<16x128xf32>
    %76 = vector.extract_strided_slice %58 {offsets = [0, 128], sizes = [16, 128], strides = [1, 1]} : vector<16x256xf32> to vector<16x128xf32>
    %77 = vector.extract_strided_slice %54 {offsets = [0, 256], sizes = [16, 128], strides = [1, 1]} : vector<16x512xf32> to vector<16x128xf32>
    %78 = arith.addf %76, %77 : vector<16x128xf32>
    %cst_40 = arith.constant 0.000000e+00 : f32
    %79 = vector.broadcast %cst_40 : f32 to vector<16x128xf32>
    %80 = arith.maximumf %78, %79 : vector<16x128xf32>
    %81 = vector.extract_strided_slice %80 {offsets = [0, 0], sizes = [16, 8], strides = [1, 1]} : vector<16x128xf32> to vector<16x8xf32>
    %82 = arith.truncf %81 : vector<16x8xf32> to vector<16x8xbf16>
    %cst_41 = arith.constant dense<0.000000e+00> : vector<16x8xf32>
    %83 = tpu.matmul %0, %82, %cst_41 {dimension_numbers = #tpu.dot_dimension_numbers<[1], [0], [0], [1], [0, 0, 1, 1], [], []>} : vector<16x16xbf16>, vector<16x8xbf16>, vector<16x8xf32> -> vector<16x8xf32>
    %c0_42 = arith.constant 0 : index
    %c128_43 = arith.constant 128 : index
    %84 = vector.load %arg7[%c0_42, %c128_43] : memref<8x256xbf16, #tpu.memory_space<vmem>>, vector<8x128xbf16>
    %85 = arith.truncf %83 : vector<16x8xf32> to vector<16x8xbf16>
    %cst_44 = arith.constant dense<0.000000e+00> : vector<16x128xf32>
    %86 = tpu.matmul %85, %84, %cst_44 {dimension_numbers = #tpu.dot_dimension_numbers<[1], [0], [0], [1], [0, 0, 1, 1], [], []>} : vector<16x8xbf16>, vector<8x128xbf16>, vector<16x128xf32> -> vector<16x128xf32>
    %87 = vector.extract_strided_slice %54 {offsets = [0, 384], sizes = [16, 128], strides = [1, 1]} : vector<16x512xf32> to vector<16x128xf32>
    %88 = arith.addf %86, %87 : vector<16x128xf32>
    %cst_45 = arith.constant 0.000000e+00 : f32
    %89 = vector.broadcast %cst_45 : f32 to vector<16x128xf32>
    %90 = arith.maximumf %88, %89 : vector<16x128xf32>
    %91 = arith.addf %75, %90 : vector<16x128xf32>
    %cst_46 = arith.constant 5.000000e-01 : f32
    %92 = vector.broadcast %cst_46 : f32 to vector<16x128xf32>
    %93 = arith.mulf %91, %92 : vector<16x128xf32>
    %c0_47 = arith.constant 0 : index
    %c0_48 = arith.constant 0 : index
    %94 = vector.load %arg10[%c0_47, %c0_48] : memref<16x128xf32, #tpu.memory_space<vmem>>, vector<16x128xf32>
    tpu.vector_store %arg10[%c0_47, %c0_48], %93 {strides = array<i32>} : memref<16x128xf32, #tpu.memory_space<vmem>>, vector<16x128xf32>,
    return
  }
}

</mosaic_0001>

<llo_original>
// kernel: tpu_custom_call.1
$region0: #{tpu_custom_call.1}
  #allocation0 [shape = 'u32[]', space=smem, size = 0x4, offset = 0x4, fixed_abs, tag = 'smem constant byte address 0x4 - core index']
  #allocation1 [shape = 'u32[144,128]{1,0:T(1,128)}', space=vmem, size = 0x12000, scoped, tag = 'internal scratch']
  %s0 = inlined_call_operand.hbm [shape: bf16[16,16], index: 0, kind: input, shape index: {}]
  %s1 = inlined_call_operand.vmem [shape: f32[16,8], index: 1, kind: input, shape index: {}]
  %s2 = inlined_call_operand.hbm [shape: bf16[8,256], index: 2, kind: input, shape index: {}]
  %s3 = inlined_call_operand.hbm [shape: bf16[16,256], index: 3, kind: input, shape index: {}]
  %s4 = inlined_call_operand.hbm [shape: bf16[8,512], index: 4, kind: input, shape index: {}]
  %s5 = inlined_call_operand.vmem [shape: f32[1,512], index: 5, kind: input, shape index: {}]
  %s6 = inlined_call_operand.hbm [shape: bf16[16,256], index: 6, kind: input, shape index: {}]
  %s7 = inlined_call_operand.hbm [shape: bf16[8,256], index: 7, kind: input, shape index: {}]
  %s8 = inlined_call_operand.vmem [shape: bf16[16,512], index: 8, kind: input, shape index: {}]
  %s9 = inlined_call_operand.vmem [shape: f32[1,512], index: 9, kind: input, shape index: {}]
  %s10 = inlined_call_operand.hbm [shape: f32[16,128], index: 10, kind: output, shape index: {}]
  %s11 = sld [smem:[#allocation0]]
  $region74: #{tpu_custom_call.1} parent=0
    _
  %s13 = ssub.s32 1, %s11
  %s14 = scalar_select 0, %s13, %s11
  $region1: #{tpu_custom_call.1} parent=0
    #allocation2 [shape = 'u8[4096]{0}', space=vmem, size = 0x1000, scoped, tag = 'input window, operand 0, single buffered']
    #allocation3 [shape = 's32[1]{0}', space=sflag, size = 0x4, scoped, tag = 'scoped memory for tpu_custom_call.1']
    #allocation4 [shape = 's32[1]{0}', space=sflag, size = 0x4, scoped, tag = 'scoped memory for tpu_custom_call.1']
    #allocation5 [shape = 'u8[4096]{0}', space=vmem, size = 0x1000, scoped, tag = 'input window, operand 2, single buffered']
    #allocation6 [shape = 's32[1]{0}', space=sflag, size = 0x4, scoped, tag = 'scoped memory for tpu_custom_call.1']
    #allocation7 [shape = 'u8[8192]{0}', space=vmem, size = 0x2000, scoped, tag = 'input window, operand 3, single buffered']
    #allocation8 [shape = 'u8[8192]{0}', space=vmem, size = 0x2000, scoped, tag = 'input window, operand 4, single buffered']
    #allocation9 [shape = 's32[1]{0}', space=sflag, size = 0x4, scoped, tag = 'scoped memory for tpu_custom_call.1']
    #allocation10 [shape = 'u8[8192]{0}', space=vmem, size = 0x2000, scoped, tag = 'input window, operand 6, single buffered']
    #allocation11 [shape = 'u8[4096]{0}', space=vmem, size = 0x1000, scoped, tag = 'input window, operand 7, single buffered']
    #allocation12 [shape = 's32[1]{0}', space=sflag, size = 0x4, scoped, tag = 'scoped memory for tpu_custom_call.1']
    #allocation13 [shape = 'u8[8192]{0}', space=vmem, size = 0x2000, scoped, tag = 'output window, operand 0, single buffered']
    %15 = vsyncpa [#allocation3], 0
    %16 = vsyncpa [#allocation6], 0
    %17 = vsyncpa [#allocation9], 0
    %18 = vsyncpa [#allocation12], 0
    %19 = vsyncpa [#allocation4], 0
    // Predicated region
    $region2: #{tpu_custom_call.1} parent=1 // pred_check
      _
    $region3: #{tpu_custom_call.1} parent=1 // pred_check_branch
      %21 = sbr.rel (0) target = $region5
    $region4: #{tpu_custom_call.1} parent=1 // pred_region
      %s23 = ssub.s32 128, 128
      %24 = vsyncadd [#allocation3], %s23
      %s25 = sshll.u32 [#allocation2], 4
      %s26 = int_to_ptr.vmem [resolvable:$true] %s25
      %31 = dma.hbm_to_vmem [thread:$0]  %s0, 128, %s26, [#allocation3], 64, 64, 4
    $region5: #{tpu_custom_call.1} parent=1 // pred_fallthru
      _
    // Predicated region
    $region6: #{tpu_custom_call.1} parent=1 // pred_check
      _
    $region7: #{tpu_custom_call.1} parent=1 // pred_check_branch
      %33 = sbr.rel (0) target = $region9
    $region8: #{tpu_custom_call.1} parent=1 // pred_region
      _
    $region9: #{tpu_custom_call.1} parent=1 // pred_fallthru
      _
    // Predicated region
    $region10: #{tpu_custom_call.1} parent=1 // pred_check
      _
    $region11: #{tpu_custom_call.1} parent=1 // pred_check_branch
      %35 = sbr.rel (0) target = $region13
    $region12: #{tpu_custom_call.1} parent=1 // pred_region
      %s37 = ssub.s32 128, 128
      %38 = vsyncadd [#allocation6], %s37
      %s40 = sshll.u32 [#allocation5], 4
      %s41 = int_to_ptr.vmem [resolvable:$true] %s40
      %43 = dma.hbm_to_vmem [thread:$0]  %s2, 128, %s41, [#allocation6]
    $region13: #{tpu_custom_call.1} parent=1 // pred_fallthru
      _
    // Predicated region
    $region14: #{tpu_custom_call.1} parent=1 // pred_check
      _
    $region15: #{tpu_custom_call.1} parent=1 // pred_check_branch
      %45 = sbr.rel (0) target = $region17
    $region16: #{tpu_custom_call.1} parent=1 // pred_region
      %s47 = ssub.s32 256, 256
      %48 = vsyncadd [#allocation6], %s47
      %s49 = sshll.u32 [#allocation7], 4
      %s50 = int_to_ptr.vmem [resolvable:$true] %s49
      %55 = dma.hbm_to_vmem [thread:$0]  %s3, 256, %s50, [#allocation6], 128, 128, 8
    $region17: #{tpu_custom_call.1} parent=1 // pred_fallthru
      _
    // Predicated region
    $region18: #{tpu_custom_call.1} parent=1 // pred_check
      _
    $region19: #{tpu_custom_call.1} parent=1 // pred_check_branch
      %57 = sbr.rel (0) target = $region21
    $region20: #{tpu_custom_call.1} parent=1 // pred_region
      %s59 = ssub.s32 256, 256
      %60 = vsyncadd [#allocation9], %s59
      %s62 = sshll.u32 [#allocation8], 4
      %s63 = int_to_ptr.vmem [resolvable:$true] %s62
      %65 = dma.hbm_to_vmem [thread:$0]  %s4, 256, %s63, [#allocation9]
    $region21: #{tpu_custom_call.1} parent=1 // pred_fallthru
      _
    // Predicated region
    $region22: #{tpu_custom_call.1} parent=1 // pred_check
      _
    $region23: #{tpu_custom_call.1} parent=1 // pred_check_branch
      %67 = sbr.rel (0) target = $region25
    $region24: #{tpu_custom_call.1} parent=1 // pred_region
      _
    $region25: #{tpu_custom_call.1} parent=1 // pred_fallthru
      _
    // Predicated region
    $region26: #{tpu_custom_call.1} parent=1 // pred_check
      _
    $region27: #{tpu_custom_call.1} parent=1 // pred_check_branch
      %69 = sbr.rel (0) target = $region29
    $region28: #{tpu_custom_call.1} parent=1 // pred_region
      %s71 = ssub.s32 256, 256
      %72 = vsyncadd [#allocation9], %s71
      %s73 = sshll.u32 [#allocation10], 4
      %s74 = int_to_ptr.vmem [resolvable:$true] %s73
      %79 = dma.hbm_to_vmem [thread:$0]  %s6, 256, %s74, [#allocation9], 128, 128, 8
    $region29: #{tpu_custom_call.1} parent=1 // pred_fallthru
      _
    // Predicated region
    $region30: #{tpu_custom_call.1} parent=1 // pred_check
      _
    $region31: #{tpu_custom_call.1} parent=1 // pred_check_branch
      %81 = sbr.rel (0) target = $region33
    $region32: #{tpu_custom_call.1} parent=1 // pred_region
      %s83 = ssub.s32 128, 128
      %84 = vsyncadd [#allocation12], %s83
      %s86 = sshll.u32 [#allocation11], 4
      %s87 = int_to_ptr.vmem [resolvable:$true] %s86
      %89 = dma.hbm_to_vmem [thread:$0]  %s7, 128, %s87, [#allocation12]
    $region33: #{tpu_custom_call.1} parent=1 // pred_fallthru
      _
    // Predicated region
    $region34: #{tpu_custom_call.1} parent=1 // pred_check
      _
    $region35: #{tpu_custom_call.1} parent=1 // pred_check_branch
      %91 = sbr.rel (0) target = $region37
    $region36: #{tpu_custom_call.1} parent=1 // pred_region
      _
    $region37: #{tpu_custom_call.1} parent=1 // pred_fallthru
      _
    // Predicated region
    $region38: #{tpu_custom_call.1} parent=1 // pred_check
      _
    $region39: #{tpu_custom_call.1} parent=1 // pred_check_branch
      %93 = sbr.rel (0) target = $region41
    $region40: #{tpu_custom_call.1} parent=1 // pred_region
      _
    $region41: #{tpu_custom_call.1} parent=1 // pred_fallthru
      _
    // Predicated region
    $region42: #{tpu_custom_call.1} parent=1 // pred_check
      _
    $region43: #{tpu_custom_call.1} parent=1 // pred_check_branch
      %95 = sbr.rel (0) target = $region45
    $region44: #{tpu_custom_call.1} parent=1 // pred_region
      %96 = dma.done [#allocation3], 128
    $region45: #{tpu_custom_call.1} parent=1 // pred_fallthru
      _
    // Predicated region
    $region46: #{tpu_custom_call.1} parent=1 // pred_check
      _
    $region47: #{tpu_custom_call.1} parent=1 // pred_check_branch
      %98 = sbr.rel (0) target = $region49
    $region48: #{tpu_custom_call.1} parent=1 // pred_region
      %99 = dma.done [#allocation6], 128
    $region49: #{tpu_custom_call.1} parent=1 // pred_fallthru
      _
    // Predicated region
    $region50: #{tpu_custom_call.1} parent=1 // pred_check
      _
    $region51: #{tpu_custom_call.1} parent=1 // pred_check_branch
      %101 = sbr.rel (0) target = $region53
    $region52: #{tpu_custom_call.1} parent=1 // pred_region
      %102 = dma.done [#allocation6], 256
    $region53: #{tpu_custom_call.1} parent=1 // pred_fallthru
      _
    // Predicated region
    $region54: #{tpu_custom_call.1} parent=1 // pred_check
      _
    $region55: #{tpu_custom_call.1} parent=1 // pred_check_branch
      %104 = sbr.rel (0) target = $region57
    $region56: #{tpu_custom_call.1} parent=1 // pred_region
      %105 = dma.done [#allocation9], 256
    $region57: #{tpu_custom_call.1} parent=1 // pred_fallthru
      _
    // Predicated region
    $region58: #{tpu_custom_call.1} parent=1 // pred_check
      _
    $region59: #{tpu_custom_call.1} parent=1 // pred_check_branch
      %107 = sbr.rel (0) target = $region61
    $region60: #{tpu_custom_call.1} parent=1 // pred_region
      %108 = dma.done [#allocation9], 256
    $region61: #{tpu_custom_call.1} parent=1 // pred_fallthru
      _
    // Predicated region
    $region62: #{tpu_custom_call.1} parent=1 // pred_check
      _
    $region63: #{tpu_custom_call.1} parent=1 // pred_check_branch
      %110 = sbr.rel (0) target = $region65
    $region64: #{tpu_custom_call.1} parent=1 // pred_region
      %111 = dma.done [#allocation12], 128
    $region65: #{tpu_custom_call.1} parent=1 // pred_fallthru
      _
    %v113 = vld [vmem:[#allocation2] sm:$0xf]
    %v114 = vld [vmem:[#allocation2 + $0x4] sm:$0xf]
    %v115 = vld [vmem:[%s1] sm:$0xff]
    %v116 = vld [vmem:[%s1 + $0x8] sm:$0xff]
    %v117 = vpack.c.bf16 %v116, %v115
    %v118 = vld [vmem:[#allocation8] sm:$0xff]
    %v119 = vld [vmem:[#allocation8 + $0x8] sm:$0xff]
    %v120 = vld [vmem:[%s5] sm:$0xf]
    %v122 = vlaneseq
    %v123 = vshrl.u32 %v122, 7
    %v124 = vsub.s32 0, %v123
    %v125 = vrot.slane %v120, %v124
    %v126 = vlaneseq
    %v127 = vshrl.u32 %v126, 7
    %v128 = vsub.s32 1, %v127
    %v129 = vrot.slane %v120, %v128
    %v130 = vlaneseq
    %v131 = vshrl.u32 %v130, 7
    %v132 = vsub.s32 2, %v131
    %v133 = vrot.slane %v120, %v132
    %v134 = vlaneseq
    %v135 = vshrl.u32 %v134, 7
    %v136 = vsub.s32 3, %v135
    %v137 = vrot.slane %v120, %v136
    %v144 = vunpack.c.l.b16 %v118
    %v145 = vunpack.c.h.b16 %v118
    %v146 = vunpack.c.l.b16 %v119
    %v147 = vunpack.c.h.b16 %v119
    %v148 = vpack.c.b16 %v144, %v144
    %v149 = vpack.c.b16 %v145, %v145
    %v150 = vpack.c.b16 %v146, %v146
    %v151 = vpack.c.b16 %v147, %v147
    %vm152 = vcmask 64512
    %v154 = vsel %vm152, %v117, 0
    %vm156 = vcmask 1043456
    %v158 = vsel %vm156, %v148, 0
    %v161 = vsel %vm156, %v149, 0
    %v164 = vsel %vm156, %v150, 0
    %v167 = vsel %vm156, %v151, 0
    %169 = vmatprep.subr.bf16.mxu0 0
    %170 = vmatpush1.bf16.msra.mxu0 0
    %171 = vmatprep.subr.bf16.mxu0 0
    %172 = vmatpush1.bf16.msra.mxu0 0
    %173 = vmatprep.subr.bf16.mxu0 0
    %174 = vmatpush1.bf16.msra.mxu0 0
    %175 = vmatprep.subr.bf16.mxu0 0
    %176 = vmatpush1.bf16.msra.mxu0 0
    %177 = vmatprep.subr.bf16.mxu0 0
    %178 = vmatpush1.bf16.msra.mxu0 0
    %179 = vmatprep.subr.bf16.mxu0 0
    %180 = vmatpush1.bf16.msra.mxu0 0
    %181 = vmatprep.subr.bf16.mxu0 0
    %182 = vmatpush1.bf16.msra.mxu0 0
    %183 = vmatprep.subr.bf16.mxu0 %v161
    %184 = vmatpush1.bf16.msra.mxu0 %v158
    %185 = vmatprep.subr.bf16.mxu0 0
    %186 = vmatpush2.bf16.msra.mxu0 0
    %187 = vmatprep.subr.bf16.mxu0 0
    %188 = vmatpush2.bf16.msra.mxu0 0
    %189 = vmatprep.subr.bf16.mxu0 0
    %190 = vmatpush2.bf16.msra.mxu0 0
    %191 = vmatprep.subr.bf16.mxu0 0
    %192 = vmatpush2.bf16.msra.mxu0 0
    %193 = vmatprep.subr.bf16.mxu0 0
    %194 = vmatpush2.bf16.msra.mxu0 0
    %195 = vmatprep.subr.bf16.mxu0 0
    %196 = vmatpush2.bf16.msra.mxu0 0
    %197 = vmatprep.subr.bf16.mxu0 0
    %198 = vmatpush2.bf16.msra.mxu0 0
    %199 = vmatprep.subr.bf16.mxu0 0
    %200 = vmatpush2.bf16.msra.mxu0 0
    %201 = vmatprep.mubr.bf16.mxu0 0
    %202 = vmatmul.mubr.bf16.gmra.mxu0 %v154
    %v203 = vpop.f32.mrf.mxu0
    %v204 = vadd.f32 %v125, %v203
    %v205 = vpop.f32.mrf.mxu0
    %v206 = vadd.f32 %v129, %v205
    %v207 = vpop.f32.mrf.mxu0
    %v208 = vadd.f32 %v125, %v207
    %v209 = vpop.f32.mrf.mxu0
    %v210 = vadd.f32 %v129, %v209
    %211 = vdwg.mxu0
    %212 = vmatprep.subr.bf16.mxu0 0
    %213 = vmatpush1.bf16.msra.mxu0 0
    %214 = vmatprep.subr.bf16.mxu0 0
    %215 = vmatpush1.bf16.msra.mxu0 0
    %216 = vmatprep.subr.bf16.mxu0 0
    %217 = vmatpush1.bf16.msra.mxu0 0
    %218 = vmatprep.subr.bf16.mxu0 0
    %219 = vmatpush1.bf16.msra.mxu0 0
    %220 = vmatprep.subr.bf16.mxu0 0
    %221 = vmatpush1.bf16.msra.mxu0 0
    %222 = vmatprep.subr.bf16.mxu0 0
    %223 = vmatpush1.bf16.msra.mxu0 0
    %224 = vmatprep.subr.bf16.mxu0 0
    %225 = vmatpush1.bf16.msra.mxu0 0
    %226 = vmatprep.subr.bf16.mxu0 %v167
    %227 = vmatpush1.bf16.msra.mxu0 %v164
    %228 = vmatprep.subr.bf16.mxu0 0
    %229 = vmatpush2.bf16.msra.mxu0 0
    %230 = vmatprep.subr.bf16.mxu0 0
    %231 = vmatpush2.bf16.msra.mxu0 0
    %232 = vmatprep.subr.bf16.mxu0 0
    %233 = vmatpush2.bf16.msra.mxu0 0
    %234 = vmatprep.subr.bf16.mxu0 0
    %235 = vmatpush2.bf16.msra.mxu0 0
    %236 = vmatprep.subr.bf16.mxu0 0
    %237 = vmatpush2.bf16.msra.mxu0 0
    %238 = vmatprep.subr.bf16.mxu0 0
    %239 = vmatpush2.bf16.msra.mxu0 0
    %240 = vmatprep.subr.bf16.mxu0 0
    %241 = vmatpush2.bf16.msra.mxu0 0
    %242 = vmatprep.subr.bf16.mxu0 0
    %243 = vmatpush2.bf16.msra.mxu0 0
    %244 = vmatprep.mubr.bf16.mxu0 0
    %245 = vmatmul.mubr.bf16.gmra.mxu0 %v154
    %v246 = vpop.f32.mrf.mxu0
    %v247 = vadd.f32 %v133, %v246
    %v248 = vpop.f32.mrf.mxu0
    %v249 = vadd.f32 %v137, %v248
    %v250 = vpop.f32.mrf.mxu0
    %v251 = vadd.f32 %v133, %v250
    %v252 = vpop.f32.mrf.mxu0
    %v253 = vadd.f32 %v137, %v252
    %254 = vdwg.mxu0
    %v257 = vunpack.c.l.b16 %v113
    %v258 = vunpack.c.l.b16 %v114
    %v259 = vpack.c.b16 %v258, %v257
    %vm260 = vcmask 130048
    %v262 = vsel %vm260, %v259, 0
    %264 = vmatprep.subr.bf16.mxu0 0
    %265 = vmatpush1.bf16.msra.mxu0 0
    %266 = vmatprep.subr.bf16.mxu0 0
    %267 = vmatpush1.bf16.msra.mxu0 0
    %268 = vmatprep.subr.bf16.mxu0 0
    %269 = vmatpush1.bf16.msra.mxu0 0
    %270 = vmatprep.subr.bf16.mxu0 0
    %271 = vmatpush1.bf16.msra.mxu0 0
    %272 = vmatprep.subr.bf16.mxu0 0
    %273 = vmatpush1.bf16.msra.mxu0 0
    %274 = vmatprep.subr.bf16.mxu0 0
    %275 = vmatpush1.bf16.msra.mxu0 0
    %276 = vmatprep.subr.bf16.mxu0 0
    %277 = vmatpush1.bf16.msra.mxu0 0
    %278 = vmatprep.subr.bf16.mxu0 0
    %279 = vmatpush1.bf16.msra.mxu0 %v117
    %280 = vmatprep.subr.bf16.mxu0 0
    %281 = vmatpush2.bf16.msra.mxu0 0
    %282 = vmatprep.subr.bf16.mxu0 0
    %283 = vmatpush2.bf16.msra.mxu0 0
    %284 = vmatprep.subr.bf16.mxu0 0
    %285 = vmatpush2.bf16.msra.mxu0 0
    %286 = vmatprep.subr.bf16.mxu0 0
    %287 = vmatpush2.bf16.msra.mxu0 0
    %288 = vmatprep.subr.bf16.mxu0 0
    %289 = vmatpush2.bf16.msra.mxu0 0
    %290 = vmatprep.subr.bf16.mxu0 0
    %291 = vmatpush2.bf16.msra.mxu0 0
    %292 = vmatprep.subr.bf16.mxu0 0
    %293 = vmatpush2.bf16.msra.mxu0 0
    %294 = vmatprep.subr.bf16.mxu0 0
    %295 = vmatpush2.bf16.msra.mxu0 0
    %296 = vmatprep.mubr.bf16.mxu0 0
    %297 = vmatmul.mubr.bf16.gmra.mxu0 %v262
    %v298 = vpop.f32.mrf.mxu0
    %v299 = vadd.f32 0.0, %v298
    %v300 = vpop.f32.mrf.mxu0
    %v301 = vpop.f32.mrf.mxu0
    %v302 = vadd.f32 0.0, %v301
    %v303 = vpop.f32.mrf.mxu0
    %304 = vdwg.mxu0
    %v305 = vpack.c.bf16 %v302, %v299
    %v306 = vld [vmem:[#allocation5] sm:$0xff]
    %v308 = vunpack.c.l.b16 %v306
    %v309 = vunpack.c.h.b16 %v306
    %v310 = vpack.c.b16 %v308, %v308
    %v311 = vpack.c.b16 %v309, %v309
    %v313 = vsel %vm152, %v305, 0
    %v316 = vsel %vm156, %v310, 0
    %v319 = vsel %vm156, %v311, 0
    %321 = vmatprep.subr.bf16.mxu0 0
    %322 = vmatpush1.bf16.msra.mxu0 0
    %323 = vmatprep.subr.bf16.mxu0 0
    %324 = vmatpush1.bf16.msra.mxu0 0
    %325 = vmatprep.subr.bf16.mxu0 0
    %326 = vmatpush1.bf16.msra.mxu0 0
    %327 = vmatprep.subr.bf16.mxu0 0
    %328 = vmatpush1.bf16.msra.mxu0 0
    %329 = vmatprep.subr.bf16.mxu0 0
    %330 = vmatpush1.bf16.msra.mxu0 0
    %331 = vmatprep.subr.bf16.mxu0 0
    %332 = vmatpush1.bf16.msra.mxu0 0
    %333 = vmatprep.subr.bf16.mxu0 0
    %334 = vmatpush1.bf16.msra.mxu0 0
    %335 = vmatprep.subr.bf16.mxu0 %v319
    %336 = vmatpush1.bf16.msra.mxu0 %v316
    %337 = vmatprep.subr.bf16.mxu0 0
    %338 = vmatpush2.bf16.msra.mxu0 0
    %339 = vmatprep.subr.bf16.mxu0 0
    %340 = vmatpush2.bf16.msra.mxu0 0
    %341 = vmatprep.subr.bf16.mxu0 0
    %342 = vmatpush2.bf16.msra.mxu0 0
    %343 = vmatprep.subr.bf16.mxu0 0
    %344 = vmatpush2.bf16.msra.mxu0 0
    %345 = vmatprep.subr.bf16.mxu0 0
    %346 = vmatpush2.bf16.msra.mxu0 0
    %347 = vmatprep.subr.bf16.mxu0 0
    %348 = vmatpush2.bf16.msra.mxu0 0
    %349 = vmatprep.subr.bf16.mxu0 0
    %350 = vmatpush2.bf16.msra.mxu0 0
    %351 = vmatprep.subr.bf16.mxu0 0
    %352 = vmatpush2.bf16.msra.mxu0 0
    %353 = vmatprep.mubr.bf16.mxu0 0
    %354 = vmatmul.mubr.bf16.gmra.mxu0 %v313
    %v355 = vpop.f32.mrf.mxu0
    %v356 = vadd.f32 0.0, %v355
    %v357 = vpop.f32.mrf.mxu0
    %v358 = vadd.f32 0.0, %v357
    %v359 = vpop.f32.mrf.mxu0
    %v360 = vadd.f32 0.0, %v359
    %v361 = vpop.f32.mrf.mxu0
    %v362 = vadd.f32 0.0, %v361
    %363 = vdwg.mxu0
    %v364 = vadd.f32 %v356, %v204
    %v365 = vadd.f32 %v360, %v208
    %v366 = vmax.f32 %v364, 0.0
    %v367 = vmax.f32 %v365, 0.0
    %v368 = vpack.c.bf16 %v367, %v366
    %369 = vmatprep.subr.bf16.mxu0 0
    %370 = vmatpush1.bf16.msra.mxu0 0
    %371 = vmatprep.subr.bf16.mxu0 0
    %372 = vmatpush1.bf16.msra.mxu0 0
    %373 = vmatprep.subr.bf16.mxu0 0
    %374 = vmatpush1.bf16.msra.mxu0 0
    %375 = vmatprep.subr.bf16.mxu0 0
    %376 = vmatpush1.bf16.msra.mxu0 0
    %377 = vmatprep.subr.bf16.mxu0 0
    %378 = vmatpush1.bf16.msra.mxu0 0
    %379 = vmatprep.subr.bf16.mxu0 0
    %380 = vmatpush1.bf16.msra.mxu0 0
    %381 = vmatprep.subr.bf16.mxu0 0
    %382 = vmatpush1.bf16.msra.mxu0 0
    %383 = vmatprep.subr.bf16.mxu0 0
    %384 = vmatpush1.bf16.msra.mxu0 %v368
    %385 = vmatprep.subr.bf16.mxu0 0
    %386 = vmatpush2.bf16.msra.mxu0 0
    %387 = vmatprep.subr.bf16.mxu0 0
    %388 = vmatpush2.bf16.msra.mxu0 0
    %389 = vmatprep.subr.bf16.mxu0 0
    %390 = vmatpush2.bf16.msra.mxu0 0
    %391 = vmatprep.subr.bf16.mxu0 0
    %392 = vmatpush2.bf16.msra.mxu0 0
    %393 = vmatprep.subr.bf16.mxu0 0
    %394 = vmatpush2.bf16.msra.mxu0 0
    %395 = vmatprep.subr.bf16.mxu0 0
    %396 = vmatpush2.bf16.msra.mxu0 0
    %397 = vmatprep.subr.bf16.mxu0 0
    %398 = vmatpush2.bf16.msra.mxu0 0
    %399 = vmatprep.subr.bf16.mxu0 0
    %400 = vmatpush2.bf16.msra.mxu0 0
    %401 = vmatprep.mubr.bf16.mxu0 0
    %402 = vmatmul.mubr.bf16.gmra.mxu0 %v262
    %v403 = vpop.f32.mrf.mxu0
    %v404 = vadd.f32 0.0, %v403
    %v405 = vpop.f32.mrf.mxu0
    %v406 = vpop.f32.mrf.mxu0
    %v407 = vadd.f32 0.0, %v406
    %v408 = vpop.f32.mrf.mxu0
    %409 = vdwg.mxu0
    %v410 = vld [vmem:[#allocation7] sm:$0xf]
    %v411 = vld [vmem:[#allocation7 + $0x8] sm:$0xf]
    %v412 = vpack.c.bf16 %v407, %v404
    %v415 = vunpack.c.l.b16 %v410
    %v416 = vunpack.c.l.b16 %v411
    %v417 = vpack.c.b16 %v416, %v415
    %v420 = vsel %vm260, %v412, 0
    %422 = vmatprep.subr.bf16.mxu0 0
    %423 = vmatpush1.bf16.msra.mxu0 0
    %424 = vmatprep.subr.bf16.mxu0 0
    %425 = vmatpush1.bf16.msra.mxu0 0
    %426 = vmatprep.subr.bf16.mxu0 0
    %427 = vmatpush1.bf16.msra.mxu0 0
    %428 = vmatprep.subr.bf16.mxu0 0
    %429 = vmatpush1.bf16.msra.mxu0 0
    %430 = vmatprep.subr.bf16.mxu0 0
    %431 = vmatpush1.bf16.msra.mxu0 0
    %432 = vmatprep.subr.bf16.mxu0 0
    %433 = vmatpush1.bf16.msra.mxu0 0
    %434 = vmatprep.subr.bf16.mxu0 0
    %435 = vmatpush1.bf16.msra.mxu0 0
    %436 = vmatprep.subr.bf16.mxu0 0
    %437 = vmatpush1.bf16.msra.mxu0 %v417
    %438 = vmatprep.subr.bf16.mxu0 0
    %439 = vmatpush2.bf16.msra.mxu0 0
    %440 = vmatprep.subr.bf16.mxu0 0
    %441 = vmatpush2.bf16.msra.mxu0 0
    %442 = vmatprep.subr.bf16.mxu0 0
    %443 = vmatpush2.bf16.msra.mxu0 0
    %444 = vmatprep.subr.bf16.mxu0 0
    %445 = vmatpush2.bf16.msra.mxu0 0
    %446 = vmatprep.subr.bf16.mxu0 0
    %447 = vmatpush2.bf16.msra.mxu0 0
    %448 = vmatprep.subr.bf16.mxu0 0
    %449 = vmatpush2.bf16.msra.mxu0 0
    %450 = vmatprep.subr.bf16.mxu0 0
    %451 = vmatpush2.bf16.msra.mxu0 0
    %452 = vmatprep.subr.bf16.mxu0 0
    %453 = vmatpush2.bf16.msra.mxu0 0
    %454 = vmatprep.mubr.bf16.mxu0 0
    %455 = vmatmul.mubr.bf16.gmra.mxu0 %v420
    %v456 = vpop.f32.mrf.mxu0
    %v457 = vadd.f32 %v206, %v456
    %v458 = vpop.f32.mrf.mxu0
    %v459 = vpop.f32.mrf.mxu0
    %v460 = vadd.f32 %v210, %v459
    %v461 = vpop.f32.mrf.mxu0
    %462 = vdwg.mxu0
    %v463 = vmax.f32 %v457, 0.0
    %v464 = vmax.f32 %v460, 0.0
    %v465 = vadd.f32 %v463, 0.0
    %v466 = vadd.f32 %v464, 0.0
    %v467 = vadd.f32 %v358, %v247
    %v468 = vadd.f32 %v362, %v251
    %v469 = vmax.f32 %v467, 0.0
    %v470 = vmax.f32 %v468, 0.0
    %v471 = vpack.c.bf16 %v470, %v469
    %472 = vmatprep.subr.bf16.mxu0 0
    %473 = vmatpush1.bf16.msra.mxu0 0
    %474 = vmatprep.subr.bf16.mxu0 0
    %475 = vmatpush1.bf16.msra.mxu0 0
    %476 = vmatprep.subr.bf16.mxu0 0
    %477 = vmatpush1.bf16.msra.mxu0 0
    %478 = vmatprep.subr.bf16.mxu0 0
    %479 = vmatpush1.bf16.msra.mxu0 0
    %480 = vmatprep.subr.bf16.mxu0 0
    %481 = vmatpush1.bf16.msra.mxu0 0
    %482 = vmatprep.subr.bf16.mxu0 0
    %483 = vmatpush1.bf16.msra.mxu0 0
    %484 = vmatprep.subr.bf16.mxu0 0
    %485 = vmatpush1.bf16.msra.mxu0 0
    %486 = vmatprep.subr.bf16.mxu0 0
    %487 = vmatpush1.bf16.msra.mxu0 %v471
    %488 = vmatprep.subr.bf16.mxu0 0
    %489 = vmatpush2.bf16.msra.mxu0 0
    %490 = vmatprep.subr.bf16.mxu0 0
    %491 = vmatpush2.bf16.msra.mxu0 0
    %492 = vmatprep.subr.bf16.mxu0 0
    %493 = vmatpush2.bf16.msra.mxu0 0
    %494 = vmatprep.subr.bf16.mxu0 0
    %495 = vmatpush2.bf16.msra.mxu0 0
    %496 = vmatprep.subr.bf16.mxu0 0
    %497 = vmatpush2.bf16.msra.mxu0 0
    %498 = vmatprep.subr.bf16.mxu0 0
    %499 = vmatpush2.bf16.msra.mxu0 0
    %500 = vmatprep.subr.bf16.mxu0 0
    %501 = vmatpush2.bf16.msra.mxu0 0
    %502 = vmatprep.subr.bf16.mxu0 0
    %503 = vmatpush2.bf16.msra.mxu0 0
    %504 = vmatprep.mubr.bf16.mxu0 0
    %505 = vmatmul.mubr.bf16.gmra.mxu0 %v262
    %v506 = vpop.f32.mrf.mxu0
    %v507 = vadd.f32 0.0, %v506
    %v508 = vpop.f32.mrf.mxu0
    %v509 = vpop.f32.mrf.mxu0
    %v510 = vadd.f32 0.0, %v509
    %v511 = vpop.f32.mrf.mxu0
    %512 = vdwg.mxu0
    %v513 = vld [vmem:[#allocation7 + $0x4] sm:$0xf]
    %v514 = vld [vmem:[#allocation7 + $0xc] sm:$0xf]
    %v515 = vpack.c.bf16 %v510, %v507
    %v518 = vunpack.c.l.b16 %v513
    %v519 = vunpack.c.l.b16 %v514
    %v520 = vpack.c.b16 %v519, %v518
    %v523 = vsel %vm260, %v515, 0
    %525 = vmatprep.subr.bf16.mxu0 0
    %526 = vmatpush1.bf16.msra.mxu0 0
    %527 = vmatprep.subr.bf16.mxu0 0
    %528 = vmatpush1.bf16.msra.mxu0 0
    %529 = vmatprep.subr.bf16.mxu0 0
    %530 = vmatpush1.bf16.msra.mxu0 0
    %531 = vmatprep.subr.bf16.mxu0 0
    %532 = vmatpush1.bf16.msra.mxu0 0
    %533 = vmatprep.subr.bf16.mxu0 0
    %534 = vmatpush1.bf16.msra.mxu0 0
    %535 = vmatprep.subr.bf16.mxu0 0
    %536 = vmatpush1.bf16.msra.mxu0 0
    %537 = vmatprep.subr.bf16.mxu0 0
    %538 = vmatpush1.bf16.msra.mxu0 0
    %539 = vmatprep.subr.bf16.mxu0 0
    %540 = vmatpush1.bf16.msra.mxu0 %v520
    %541 = vmatprep.subr.bf16.mxu0 0
    %542 = vmatpush2.bf16.msra.mxu0 0
    %543 = vmatprep.subr.bf16.mxu0 0
    %544 = vmatpush2.bf16.msra.mxu0 0
    %545 = vmatprep.subr.bf16.mxu0 0
    %546 = vmatpush2.bf16.msra.mxu0 0
    %547 = vmatprep.subr.bf16.mxu0 0
    %548 = vmatpush2.bf16.msra.mxu0 0
    %549 = vmatprep.subr.bf16.mxu0 0
    %550 = vmatpush2.bf16.msra.mxu0 0
    %551 = vmatprep.subr.bf16.mxu0 0
    %552 = vmatpush2.bf16.msra.mxu0 0
    %553 = vmatprep.subr.bf16.mxu0 0
    %554 = vmatpush2.bf16.msra.mxu0 0
    %555 = vmatprep.subr.bf16.mxu0 0
    %556 = vmatpush2.bf16.msra.mxu0 0
    %557 = vmatprep.mubr.bf16.mxu0 0
    %558 = vmatmul.mubr.bf16.gmra.mxu0 %v523
    %v559 = vpop.f32.mrf.mxu0
    %v560 = vadd.f32 %v249, %v559
    %v561 = vpop.f32.mrf.mxu0
    %v562 = vpop.f32.mrf.mxu0
    %v563 = vadd.f32 %v253, %v562
    %v564 = vpop.f32.mrf.mxu0
    %565 = vdwg.mxu0
    %v566 = vmax.f32 %v560, 0.0
    %v567 = vmax.f32 %v563, 0.0
    %v568 = vadd.f32 %v465, %v566
    %v569 = vadd.f32 %v466, %v567
    %v570 = vmul.f32 %v568, 0.5
    %v571 = vmul.f32 %v569, 0.5
    %v572 = vtanh.pop %v570
    %v573 = vtanh.pop %v571
    %v574 = vpack.c.bf16 %v573, %v572
    %v575 = vld [vmem:[%s8] sm:$0xff]
    %v576 = vld [vmem:[%s8 + $0x8] sm:$0xff]
    %v577 = vld [vmem:[%s8 + $0x10] sm:$0xff]
    %v578 = vld [vmem:[%s8 + $0x18] sm:$0xff]
    %v579 = vld [vmem:[%s9] sm:$0xf]
    %v581 = vlaneseq
    %v582 = vshrl.u32 %v581, 7
    %v583 = vsub.s32 0, %v582
    %v584 = vrot.slane %v579, %v583
    %v585 = vlaneseq
    %v586 = vshrl.u32 %v585, 7
    %v587 = vsub.s32 1, %v586
    %v588 = vrot.slane %v579, %v587
    %v589 = vlaneseq
    %v590 = vshrl.u32 %v589, 7
    %v591 = vsub.s32 2, %v590
    %v592 = vrot.slane %v579, %v591
    %v593 = vlaneseq
    %v594 = vshrl.u32 %v593, 7
    %v595 = vsub.s32 3, %v594
    %v596 = vrot.slane %v579, %v595
    %v605 = vunpack.c.l.b16 %v575
    %v606 = vunpack.c.h.b16 %v575
    %v607 = vunpack.c.l.b16 %v576
    %v608 = vunpack.c.h.b16 %v576
    %v609 = vunpack.c.l.b16 %v577
    %v610 = vunpack.c.h.b16 %v577
    %v611 = vunpack.c.l.b16 %v578
    %v612 = vunpack.c.h.b16 %v578
    %v613 = vpack.c.b16 %v609, %v605
    %v614 = vpack.c.b16 %v610, %v606
    %v615 = vpack.c.b16 %v611, %v607
    %v616 = vpack.c.b16 %v612, %v608
    %v622 = vsel %vm260, %v574, 0
    %624 = vmatprep.subr.bf16.mxu0 0
    %625 = vmatpush1.bf16.msra.mxu0 0
    %626 = vmatprep.subr.bf16.mxu0 0
    %627 = vmatpush1.bf16.msra.mxu0 0
    %628 = vmatprep.subr.bf16.mxu0 0
    %629 = vmatpush1.bf16.msra.mxu0 0
    %630 = vmatprep.subr.bf16.mxu0 0
    %631 = vmatpush1.bf16.msra.mxu0 0
    %632 = vmatprep.subr.bf16.mxu0 0
    %633 = vmatpush1.bf16.msra.mxu0 0
    %634 = vmatprep.subr.bf16.mxu0 0
    %635 = vmatpush1.bf16.msra.mxu0 0
    %636 = vmatprep.subr.bf16.mxu0 0
    %637 = vmatpush1.bf16.msra.mxu0 0
    %638 = vmatprep.subr.bf16.mxu0 %v614
    %639 = vmatpush1.bf16.msra.mxu0 %v613
    %640 = vmatprep.subr.bf16.mxu0 0
    %641 = vmatpush2.bf16.msra.mxu0 0
    %642 = vmatprep.subr.bf16.mxu0 0
    %643 = vmatpush2.bf16.msra.mxu0 0
    %644 = vmatprep.subr.bf16.mxu0 0
    %645 = vmatpush2.bf16.msra.mxu0 0
    %646 = vmatprep.subr.bf16.mxu0 0
    %647 = vmatpush2.bf16.msra.mxu0 0
    %648 = vmatprep.subr.bf16.mxu0 0
    %649 = vmatpush2.bf16.msra.mxu0 0
    %650 = vmatprep.subr.bf16.mxu0 0
    %651 = vmatpush2.bf16.msra.mxu0 0
    %652 = vmatprep.subr.bf16.mxu0 0
    %653 = vmatpush2.bf16.msra.mxu0 0
    %654 = vmatprep.subr.bf16.mxu0 0
    %655 = vmatpush2.bf16.msra.mxu0 0
    %656 = vmatprep.mubr.bf16.mxu0 0
    %657 = vmatmul.mubr.bf16.gmra.mxu0 %v622
    %v658 = vpop.f32.mrf.mxu0
    %v659 = vadd.f32 %v584, %v658
    %v660 = vpop.f32.mrf.mxu0
    %v661 = vadd.f32 %v588, %v660
    %v662 = vpop.f32.mrf.mxu0
    %v663 = vadd.f32 %v584, %v662
    %v664 = vpop.f32.mrf.mxu0
    %v665 = vadd.f32 %v588, %v664
    %666 = vdwg.mxu0
    %667 = vmatprep.subr.bf16.mxu0 0
    %668 = vmatpush1.bf16.msra.mxu0 0
    %669 = vmatprep.subr.bf16.mxu0 0
    %670 = vmatpush1.bf16.msra.mxu0 0
    %671 = vmatprep.subr.bf16.mxu0 0
    %672 = vmatpush1.bf16.msra.mxu0 0
    %673 = vmatprep.subr.bf16.mxu0 0
    %674 = vmatpush1.bf16.msra.mxu0 0
    %675 = vmatprep.subr.bf16.mxu0 0
    %676 = vmatpush1.bf16.msra.mxu0 0
    %677 = vmatprep.subr.bf16.mxu0 0
    %678 = vmatpush1.bf16.msra.mxu0 0
    %679 = vmatprep.subr.bf16.mxu0 0
    %680 = vmatpush1.bf16.msra.mxu0 0
    %681 = vmatprep.subr.bf16.mxu0 %v616
    %682 = vmatpush1.bf16.msra.mxu0 %v615
    %683 = vmatprep.subr.bf16.mxu0 0
    %684 = vmatpush2.bf16.msra.mxu0 0
    %685 = vmatprep.subr.bf16.mxu0 0
    %686 = vmatpush2.bf16.msra.mxu0 0
    %687 = vmatprep.subr.bf16.mxu0 0
    %688 = vmatpush2.bf16.msra.mxu0 0
    %689 = vmatprep.subr.bf16.mxu0 0
    %690 = vmatpush2.bf16.msra.mxu0 0
    %691 = vmatprep.subr.bf16.mxu0 0
    %692 = vmatpush2.bf16.msra.mxu0 0
    %693 = vmatprep.subr.bf16.mxu0 0
    %694 = vmatpush2.bf16.msra.mxu0 0
    %695 = vmatprep.subr.bf16.mxu0 0
    %696 = vmatpush2.bf16.msra.mxu0 0
    %697 = vmatprep.subr.bf16.mxu0 0
    %698 = vmatpush2.bf16.msra.mxu0 0
    %699 = vmatprep.mubr.bf16.mxu0 0
    %700 = vmatmul.mubr.bf16.gmra.mxu0 %v622
    %v701 = vpop.f32.mrf.mxu0
    %v702 = vadd.f32 %v592, %v701
    %v703 = vpop.f32.mrf.mxu0
    %v704 = vadd.f32 %v596, %v703
    %v705 = vpop.f32.mrf.mxu0
    %v706 = vadd.f32 %v592, %v705
    %v707 = vpop.f32.mrf.mxu0
    %v708 = vadd.f32 %v596, %v707
    %709 = vdwg.mxu0
    %710 = vmatprep.subr.bf16.mxu0 0
    %711 = vmatpush1.bf16.msra.mxu0 0
    %712 = vmatprep.subr.bf16.mxu0 0
    %713 = vmatpush1.bf16.msra.mxu0 0
    %714 = vmatprep.subr.bf16.mxu0 0
    %715 = vmatpush1.bf16.msra.mxu0 0
    %716 = vmatprep.subr.bf16.mxu0 0
    %717 = vmatpush1.bf16.msra.mxu0 0
    %718 = vmatprep.subr.bf16.mxu0 0
    %719 = vmatpush1.bf16.msra.mxu0 0
    %720 = vmatprep.subr.bf16.mxu0 0
    %721 = vmatpush1.bf16.msra.mxu0 0
    %722 = vmatprep.subr.bf16.mxu0 0
    %723 = vmatpush1.bf16.msra.mxu0 0
    %724 = vmatprep.subr.bf16.mxu0 0
    %725 = vmatpush1.bf16.msra.mxu0 %v574
    %726 = vmatprep.subr.bf16.mxu0 0
    %727 = vmatpush2.bf16.msra.mxu0 0
    %728 = vmatprep.subr.bf16.mxu0 0
    %729 = vmatpush2.bf16.msra.mxu0 0
    %730 = vmatprep.subr.bf16.mxu0 0
    %731 = vmatpush2.bf16.msra.mxu0 0
    %732 = vmatprep.subr.bf16.mxu0 0
    %733 = vmatpush2.bf16.msra.mxu0 0
    %734 = vmatprep.subr.bf16.mxu0 0
    %735 = vmatpush2.bf16.msra.mxu0 0
    %736 = vmatprep.subr.bf16.mxu0 0
    %737 = vmatpush2.bf16.msra.mxu0 0
    %738 = vmatprep.subr.bf16.mxu0 0
    %739 = vmatpush2.bf16.msra.mxu0 0
    %740 = vmatprep.subr.bf16.mxu0 0
    %741 = vmatpush2.bf16.msra.mxu0 0
    %742 = vmatprep.mubr.bf16.mxu0 0
    %743 = vmatmul.mubr.bf16.gmra.mxu0 %v262
    %v744 = vpop.f32.mrf.mxu0
    %v745 = vadd.f32 0.0, %v744
    %v746 = vpop.f32.mrf.mxu0
    %v747 = vpop.f32.mrf.mxu0
    %v748 = vadd.f32 0.0, %v747
    %v749 = vpop.f32.mrf.mxu0
    %750 = vdwg.mxu0
    %v751 = vpack.c.bf16 %v748, %v745
    %v752 = vld [vmem:[#allocation10] sm:$0xff]
    %v753 = vld [vmem:[#allocation10 + $0x8] sm:$0xff]
    %v756 = vunpack.c.l.b16 %v752
    %v757 = vunpack.c.h.b16 %v752
    %v758 = vunpack.c.l.b16 %v753
    %v759 = vunpack.c.h.b16 %v753
    %v760 = vpack.c.b16 %v758, %v756
    %v761 = vpack.c.b16 %v759, %v757
    %v765 = vsel %vm260, %v751, 0
    %767 = vmatprep.subr.bf16.mxu0 0
    %768 = vmatpush1.bf16.msra.mxu0 0
    %769 = vmatprep.subr.bf16.mxu0 0
    %770 = vmatpush1.bf16.msra.mxu0 0
    %771 = vmatprep.subr.bf16.mxu0 0
    %772 = vmatpush1.bf16.msra.mxu0 0
    %773 = vmatprep.subr.bf16.mxu0 0
    %774 = vmatpush1.bf16.msra.mxu0 0
    %775 = vmatprep.subr.bf16.mxu0 0
    %776 = vmatpush1.bf16.msra.mxu0 0
    %777 = vmatprep.subr.bf16.mxu0 0
    %778 = vmatpush1.bf16.msra.mxu0 0
    %779 = vmatprep.subr.bf16.mxu0 0
    %780 = vmatpush1.bf16.msra.mxu0 0
    %781 = vmatprep.subr.bf16.mxu0 %v761
    %782 = vmatpush1.bf16.msra.mxu0 %v760
    %783 = vmatprep.subr.bf16.mxu0 0
    %784 = vmatpush2.bf16.msra.mxu0 0
    %785 = vmatprep.subr.bf16.mxu0 0
    %786 = vmatpush2.bf16.msra.mxu0 0
    %787 = vmatprep.subr.bf16.mxu0 0
    %788 = vmatpush2.bf16.msra.mxu0 0
    %789 = vmatprep.subr.bf16.mxu0 0
    %790 = vmatpush2.bf16.msra.mxu0 0
    %791 = vmatprep.subr.bf16.mxu0 0
    %792 = vmatpush2.bf16.msra.mxu0 0
    %793 = vmatprep.subr.bf16.mxu0 0
    %794 = vmatpush2.bf16.msra.mxu0 0
    %795 = vmatprep.subr.bf16.mxu0 0
    %796 = vmatpush2.bf16.msra.mxu0 0
    %797 = vmatprep.subr.bf16.mxu0 0
    %798 = vmatpush2.bf16.msra.mxu0 0
    %799 = vmatprep.mubr.bf16.mxu0 0
    %800 = vmatmul.mubr.bf16.gmra.mxu0 %v765
    %v801 = vpop.f32.mrf.mxu0
    %v802 = vadd.f32 0.0, %v801
    %v803 = vpop.f32.mrf.mxu0
    %v804 = vadd.f32 0.0, %v803
    %v805 = vpop.f32.mrf.mxu0
    %v806 = vadd.f32 0.0, %v805
    %v807 = vpop.f32.mrf.mxu0
    %v808 = vadd.f32 0.0, %v807
    %809 = vdwg.mxu0
    %v810 = vadd.f32 %v802, %v659
    %v811 = vadd.f32 %v806, %v663
    %v812 = vmax.f32 %v810, 0.0
    %v813 = vmax.f32 %v811, 0.0
    %v814 = vpack.c.bf16 %v813, %v812
    %815 = vmatprep.subr.bf16.mxu0 0
    %816 = vmatpush1.bf16.msra.mxu0 0
    %817 = vmatprep.subr.bf16.mxu0 0
    %818 = vmatpush1.bf16.msra.mxu0 0
    %819 = vmatprep.subr.bf16.mxu0 0
    %820 = vmatpush1.bf16.msra.mxu0 0
    %821 = vmatprep.subr.bf16.mxu0 0
    %822 = vmatpush1.bf16.msra.mxu0 0
    %823 = vmatprep.subr.bf16.mxu0 0
    %824 = vmatpush1.bf16.msra.mxu0 0
    %825 = vmatprep.subr.bf16.mxu0 0
    %826 = vmatpush1.bf16.msra.mxu0 0
    %827 = vmatprep.subr.bf16.mxu0 0
    %828 = vmatpush1.bf16.msra.mxu0 0
    %829 = vmatprep.subr.bf16.mxu0 0
    %830 = vmatpush1.bf16.msra.mxu0 %v814
    %831 = vmatprep.subr.bf16.mxu0 0
    %832 = vmatpush2.bf16.msra.mxu0 0
    %833 = vmatprep.subr.bf16.mxu0 0
    %834 = vmatpush2.bf16.msra.mxu0 0
    %835 = vmatprep.subr.bf16.mxu0 0
    %836 = vmatpush2.bf16.msra.mxu0 0
    %837 = vmatprep.subr.bf16.mxu0 0
    %838 = vmatpush2.bf16.msra.mxu0 0
    %839 = vmatprep.subr.bf16.mxu0 0
    %840 = vmatpush2.bf16.msra.mxu0 0
    %841 = vmatprep.subr.bf16.mxu0 0
    %842 = vmatpush2.bf16.msra.mxu0 0
    %843 = vmatprep.subr.bf16.mxu0 0
    %844 = vmatpush2.bf16.msra.mxu0 0
    %845 = vmatprep.subr.bf16.mxu0 0
    %846 = vmatpush2.bf16.msra.mxu0 0
    %847 = vmatprep.mubr.bf16.mxu0 0
    %848 = vmatmul.mubr.bf16.gmra.mxu0 %v262
    %v849 = vpop.f32.mrf.mxu0
    %v850 = vadd.f32 0.0, %v849
    %v851 = vpop.f32.mrf.mxu0
    %v852 = vpop.f32.mrf.mxu0
    %v853 = vadd.f32 0.0, %v852
    %v854 = vpop.f32.mrf.mxu0
    %855 = vdwg.mxu0
    %v856 = vld [vmem:[#allocation11] sm:$0xf]
    %v857 = vpack.c.bf16 %v853, %v850
    %v859 = vsel %vm152, %v857, 0
    %v862 = vsel %vm156, %v856, 0
    %864 = vmatprep.subr.bf16.mxu0 0
    %865 = vmatpush1.bf16.msra.mxu0 0
    %866 = vmatprep.subr.bf16.mxu0 0
    %867 = vmatpush1.bf16.msra.mxu0 0
    %868 = vmatprep.subr.bf16.mxu0 0
    %869 = vmatpush1.bf16.msra.mxu0 0
    %870 = vmatprep.subr.bf16.mxu0 0
    %871 = vmatpush1.bf16.msra.mxu0 0
    %872 = vmatprep.subr.bf16.mxu0 0
    %873 = vmatpush1.bf16.msra.mxu0 0
    %874 = vmatprep.subr.bf16.mxu0 0
    %875 = vmatpush1.bf16.msra.mxu0 0
    %876 = vmatprep.subr.bf16.mxu0 0
    %877 = vmatpush1.bf16.msra.mxu0 0
    %878 = vmatprep.subr.bf16.mxu0 0
    %879 = vmatpush1.bf16.msra.mxu0 %v862
    %880 = vmatprep.subr.bf16.mxu0 0
    %881 = vmatpush2.bf16.msra.mxu0 0
    %882 = vmatprep.subr.bf16.mxu0 0
    %883 = vmatpush2.bf16.msra.mxu0 0
    %884 = vmatprep.subr.bf16.mxu0 0
    %885 = vmatpush2.bf16.msra.mxu0 0
    %886 = vmatprep.subr.bf16.mxu0 0
    %887 = vmatpush2.bf16.msra.mxu0 0
    %888 = vmatprep.subr.bf16.mxu0 0
    %889 = vmatpush2.bf16.msra.mxu0 0
    %890 = vmatprep.subr.bf16.mxu0 0
    %891 = vmatpush2.bf16.msra.mxu0 0
    %892 = vmatprep.subr.bf16.mxu0 0
    %893 = vmatpush2.bf16.msra.mxu0 0
    %894 = vmatprep.subr.bf16.mxu0 0
    %895 = vmatpush2.bf16.msra.mxu0 0
    %896 = vmatprep.mubr.bf16.mxu0 0
    %897 = vmatmul.mubr.bf16.gmra.mxu0 %v859
    %v898 = vpop.f32.mrf.mxu0
    %v899 = vadd.f32 %v661, %v898
    %v900 = vpop.f32.mrf.mxu0
    %v901 = vpop.f32.mrf.mxu0
    %v902 = vadd.f32 %v665, %v901
    %v903 = vpop.f32.mrf.mxu0
    %904 = vdwg.mxu0
    %v905 = vmax.f32 %v899, 0.0
    %v906 = vmax.f32 %v902, 0.0
    %v907 = vadd.f32 %v905, 0.0
    %v908 = vadd.f32 %v906, 0.0
    %v909 = vadd.f32 %v804, %v702
    %v910 = vadd.f32 %v808, %v706
    %v911 = vmax.f32 %v909, 0.0
    %v912 = vmax.f32 %v910, 0.0
    %v913 = vpack.c.bf16 %v912, %v911
    %914 = vmatprep.subr.bf16.mxu0 0
    %915 = vmatpush1.bf16.msra.mxu0 0
    %916 = vmatprep.subr.bf16.mxu0 0
    %917 = vmatpush1.bf16.msra.mxu0 0
    %918 = vmatprep.subr.bf16.mxu0 0
    %919 = vmatpush1.bf16.msra.mxu0 0
    %920 = vmatprep.subr.bf16.mxu0 0
    %921 = vmatpush1.bf16.msra.mxu0 0
    %922 = vmatprep.subr.bf16.mxu0 0
    %923 = vmatpush1.bf16.msra.mxu0 0
    %924 = vmatprep.subr.bf16.mxu0 0
    %925 = vmatpush1.bf16.msra.mxu0 0
    %926 = vmatprep.subr.bf16.mxu0 0
    %927 = vmatpush1.bf16.msra.mxu0 0
    %928 = vmatprep.subr.bf16.mxu0 0
    %929 = vmatpush1.bf16.msra.mxu0 %v913
    %930 = vmatprep.subr.bf16.mxu0 0
    %931 = vmatpush2.bf16.msra.mxu0 0
    %932 = vmatprep.subr.bf16.mxu0 0
    %933 = vmatpush2.bf16.msra.mxu0 0
    %934 = vmatprep.subr.bf16.mxu0 0
    %935 = vmatpush2.bf16.msra.mxu0 0
    %936 = vmatprep.subr.bf16.mxu0 0
    %937 = vmatpush2.bf16.msra.mxu0 0
    %938 = vmatprep.subr.bf16.mxu0 0
    %939 = vmatpush2.bf16.msra.mxu0 0
    %940 = vmatprep.subr.bf16.mxu0 0
    %941 = vmatpush2.bf16.msra.mxu0 0
    %942 = vmatprep.subr.bf16.mxu0 0
    %943 = vmatpush2.bf16.msra.mxu0 0
    %944 = vmatprep.subr.bf16.mxu0 0
    %945 = vmatpush2.bf16.msra.mxu0 0
    %946 = vmatprep.mubr.bf16.mxu0 0
    %947 = vmatmul.mubr.bf16.gmra.mxu0 %v262
    %v948 = vpop.f32.mrf.mxu0
    %v949 = vadd.f32 0.0, %v948
    %v950 = vpop.f32.mrf.mxu0
    %v951 = vpop.f32.mrf.mxu0
    %v952 = vadd.f32 0.0, %v951
    %v953 = vpop.f32.mrf.mxu0
    %954 = vdwg.mxu0
    %v955 = vld [vmem:[#allocation11 + $0x4] sm:$0xf]
    %v956 = vpack.c.bf16 %v952, %v949
    %v958 = vsel %vm152, %v956, 0
    %v961 = vsel %vm156, %v955, 0
    %963 = vmatprep.subr.bf16.mxu0 0
    %964 = vmatpush1.bf16.msra.mxu0 0
    %965 = vmatprep.subr.bf16.mxu0 0
    %966 = vmatpush1.bf16.msra.mxu0 0
    %967 = vmatprep.subr.bf16.mxu0 0
    %968 = vmatpush1.bf16.msra.mxu0 0
    %969 = vmatprep.subr.bf16.mxu0 0
    %970 = vmatpush1.bf16.msra.mxu0 0
    %971 = vmatprep.subr.bf16.mxu0 0
    %972 = vmatpush1.bf16.msra.mxu0 0
    %973 = vmatprep.subr.bf16.mxu0 0
    %974 = vmatpush1.bf16.msra.mxu0 0
    %975 = vmatprep.subr.bf16.mxu0 0
    %976 = vmatpush1.bf16.msra.mxu0 0
    %977 = vmatprep.subr.bf16.mxu0 0
    %978 = vmatpush1.bf16.msra.mxu0 %v961
    %979 = vmatprep.subr.bf16.mxu0 0
    %980 = vmatpush2.bf16.msra.mxu0 0
    %981 = vmatprep.subr.bf16.mxu0 0
    %982 = vmatpush2.bf16.msra.mxu0 0
    %983 = vmatprep.subr.bf16.mxu0 0
    %984 = vmatpush2.bf16.msra.mxu0 0
    %985 = vmatprep.subr.bf16.mxu0 0
    %986 = vmatpush2.bf16.msra.mxu0 0
    %987 = vmatprep.subr.bf16.mxu0 0
    %988 = vmatpush2.bf16.msra.mxu0 0
    %989 = vmatprep.subr.bf16.mxu0 0
    %990 = vmatpush2.bf16.msra.mxu0 0
    %991 = vmatprep.subr.bf16.mxu0 0
    %992 = vmatpush2.bf16.msra.mxu0 0
    %993 = vmatprep.subr.bf16.mxu0 0
    %994 = vmatpush2.bf16.msra.mxu0 0
    %995 = vmatprep.mubr.bf16.mxu0 0
    %996 = vmatmul.mubr.bf16.gmra.mxu0 %v958
    %v997 = vpop.f32.mrf.mxu0
    %v998 = vadd.f32 %v704, %v997
    %v999 = vpop.f32.mrf.mxu0
    %v1000 = vpop.f32.mrf.mxu0
    %v1001 = vadd.f32 %v708, %v1000
    %v1002 = vpop.f32.mrf.mxu0
    %1003 = vdwg.mxu0
    %v1004 = vmax.f32 %v998, 0.0
    %v1005 = vmax.f32 %v1001, 0.0
    %v1006 = vadd.f32 %v907, %v1004
    %v1007 = vadd.f32 %v908, %v1005
    %v1008 = vmul.f32 %v1006, 0.5
    %v1009 = vmul.f32 %v1007, 0.5
    %1010 = vst [vmem:[#allocation13] sm:$0xff] %v1008
    %1011 = vst [vmem:[#allocation13 + $0x8] sm:$0xff] %v1009
    // Predicated region
    $region66: #{tpu_custom_call.1} parent=1 // pred_check
      _
    $region67: #{tpu_custom_call.1} parent=1 // pred_check_branch
      %1013 = sbr.rel (0) target = $region69
    $region68: #{tpu_custom_call.1} parent=1 // pred_region
      %s1015 = ssub.s32 256, 256
      %1016 = vsyncadd [#allocation4], %s1015
      %s1017 = sshll.u32 [#allocation13], 4
      %s1018 = int_to_ptr.vmem [resolvable:$true] %s1017
      %1023 = dma.vmem_to_hbm [thread:$0]  %s1018, 256, %s10, [#allocation4], 128, 128, 8
    $region69: #{tpu_custom_call.1} parent=1 // pred_fallthru
      _
    // Predicated region
    $region70: #{tpu_custom_call.1} parent=1 // pred_check
      _
    $region71: #{tpu_custom_call.1} parent=1 // pred_check_branch
      %1025 = sbr.rel (0) target = $region73
    $region72: #{tpu_custom_call.1} parent=1 // pred_region
      %1026 = dma.done [#allocation4], 256
    $region73: #{tpu_custom_call.1} parent=1 // pred_fallthru
      _
    %1027 = vsyncpa [#allocation3], 1
    %1028 = vsyncpa [#allocation6], 1
    %1029 = vsyncpa [#allocation9], 1
    %1030 = vsyncpa [#allocation12], 1
    %1031 = vsyncpa [#allocation4], 1

</llo_original>
